<compile_context>
chip_gen: v5e
topology: v5e:2x2
jax: 0.10.0
libtpu: 0.0.40
codegen_flags: <defaults>
</compile_context>

<pallas_src>
import functools

import jax
import jax.numpy as jnp
from jax.experimental import pallas as pl
from jax.experimental.pallas import tpu as pltpu

NUM_MODELS = 4
NUM_CLASSES = 8                        # classes per synthetic view model
PACKED = NUM_MODELS * NUM_CLASSES      # 32 lanes: 4 models contiguous in lanes
NEG_BIG = -1e30


def _routing_kernel(x_ref, w_ref, b_ref, cm_ref, out_ref, *, mode):
    """Fused per-block routing.

    x_ref  : VMEM (TM, D)   f32   input rows (cast to bf16 in-kernel)
    w_ref  : VMEM (D, 32)   bf16  packed weights (4 models along lanes)
    b_ref  : VMEM (1, 32)   f32   packed biases
    cm_ref : VMEM (1, 32)   f32   flattened per-model class maps
    out_ref: VMEM (TM, 1)   int32 routed + remapped prediction per row
    """
    x = x_ref[...].astype(jnp.bfloat16)                      # in-kernel cast (VPU)
    lg = jnp.dot(x, w_ref[...],
                 preferred_element_type=jnp.float32) + b_ref[...]   # (TM, 32) f32

    lane = jax.lax.broadcasted_iota(jnp.int32, lg.shape, 1)          # (TM, 32)
    lane_f = lane.astype(jnp.float32)

    best_conf = None
    best_flat = None                                          # packed index in [0, 32)
    for m in range(NUM_MODELS):                               # tiny static unroll
        lo = m * NUM_CLASSES
        in_m = (lane >= lo) & (lane < lo + NUM_CLASSES)       # this model's lane group
        lg_m = jnp.where(in_m, lg, NEG_BIG)

        mx = jnp.max(lg_m, axis=-1, keepdims=True)            # (TM, 1) group max
        # first-occurrence argmax within the group (torch.argmax semantics),
        # expressed directly as the packed lane index
        flat = jnp.min(jnp.where(lg_m >= mx, lane_f, float(PACKED)),
                       axis=-1, keepdims=True)                # (TM, 1)

        if mode == "logit":
            conf = mx                                         # max logit
        else:  # softmax: max prob == 1/sum(exp(lg - max)); route on -sum
            e = jnp.exp(jnp.where(in_m, lg - mx, NEG_BIG))    # pad lanes -> exactly 0
            conf = -jnp.sum(e, axis=-1, keepdims=True)

        if m == 0:
            best_conf, best_flat = conf, flat
        else:
            better = conf > best_conf                         # strict: ties keep first
            best_conf = jnp.where(better, conf, best_conf)
            best_flat = jnp.where(better, flat, best_flat)

    # Vectorized per-row class-map remap: one-hot select over the 32 lanes.
    sel = lane == best_flat.astype(jnp.int32)                 # (TM, 32)
    remapped = jnp.sum(jnp.where(sel, cm_ref[...], 0.0), axis=-1, keepdims=True)
    out_ref[...] = remapped.astype(jnp.int32)


def _round_up(n, m):
    return (n + m - 1) // m * m


@functools.partial(jax.jit, static_argnames=("mode", "block_m"))
def confidence_based_routing(x, w_packed, b_packed, class_map_f32,
                             mode="softmax", block_m=256):
    """Pallas-backed forward of Confidence_Based_Routing.

    x: (B, C, H, W) f32.  Returns (B,) int32 routed + class-mapped predictions
    (per-example routing; for B == 1 this is exactly the original module).
    block_m=256 fills the v6e/v7x MXU; use 128 on v5e if tuning per chip.
    """
    if mode not in ("logit", "softmax"):
        raise ValueError("No mode selected")

    B = x.shape[0]
    x_flat = x.reshape(B, -1)                 # stays f32; cast inside the kernel
    D = x_flat.shape[1]

    tm = min(block_m, _round_up(B, 8))        # small batches stay small
    b_pad = _round_up(B, tm)
    if b_pad != B:
        x_flat = jnp.pad(x_flat, ((0, b_pad - B), (0, 0)))

    out = pl.pallas_call(
        functools.partial(_routing_kernel, mode=mode),
        out_shape=jax.ShapeDtypeStruct((b_pad, 1), jnp.int32),
        grid=(b_pad // tm,),
        in_specs=[
            pl.BlockSpec((tm, D), lambda i: (i, 0)),          # x tile
            pl.BlockSpec((D, PACKED), lambda i: (0, 0)),      # packed W, resident
            pl.BlockSpec((1, PACKED), lambda i: (0, 0)),      # packed bias, resident
            pl.BlockSpec((1, PACKED), lambda i: (0, 0)),      # class maps, resident
        ],
        out_specs=pl.BlockSpec((tm, 1), lambda i: (i, 0)),
        compiler_params=pltpu.CompilerParams(
            dimension_semantics=("parallel",)),               # 2 TCs on v7x
    )(x_flat, w_packed, b_packed, class_map_f32)
    return out[:B, 0]


def make_params(key, D):
    """Deterministic synthetic parameters for the 4 linear 'view models'."""
    kw, kb = jax.random.split(key)
    w = jax.random.normal(kw, (NUM_MODELS, D, NUM_CLASSES), jnp.float32) * 0.05
    b = jax.random.normal(kb, (NUM_MODELS, NUM_CLASSES), jnp.float32) * 0.1
    # Pack the 4 models contiguously along the lane axis: (D, 32), lane-dense,
    # NO 128-lane zero padding in HBM; bf16 halves weight DMA again.
    w_packed = jnp.transpose(w, (1, 0, 2)).reshape(D, PACKED).astype(jnp.bfloat16)
    b_packed = b.reshape(1, PACKED)
    return w_packed, b_packed, b


def make_class_maps():
    # TODO(synk): class_maps() is external to the provided module; use
    # deterministic synthetic per-model class remappings (fixed permutations).
    maps = []
    for m in range(NUM_MODELS):
        maps.append([(c * (m + 1) + m) % NUM_CLASSES for c in range(NUM_CLASSES)])
    return jnp.asarray(maps, dtype=jnp.int32)        # (NUM_MODELS, NUM_CLASSES)


def _reference(x, w_packed, b, class_map, mode):
    """Pure-JAX per-row reference with the same bf16 matmul precision."""
    B = x.shape[0]
    x_bf = x.reshape(B, -1).astype(jnp.bfloat16)
    lg = jnp.dot(x_bf, w_packed, preferred_element_type=jnp.float32)
    lg = lg.reshape(B, NUM_MODELS, NUM_CLASSES) + b[None]
    sm = jax.nn.softmax(lg, axis=-1)
    preds = jnp.argmax(sm, axis=-1)                                      # (B, 4)
    conf = jnp.max(lg, axis=-1) if mode == "logit" else jnp.max(sm, axis=-1)
    route = jnp.argmax(conf, axis=-1)                                    # (B,)
    cls = jnp.take_along_axis(preds, route[:, None], axis=-1)[:, 0]
    return class_map[route, cls].astype(jnp.int32)


if __name__ == "__main__":
    key = jax.random.PRNGKey(0)
    kx, kp = jax.random.split(key)

    # batch=2, channels=4, 16x16 spatial -> D = 1024
    B, C, H, W = 2, 4, 16, 16
    x = jax.random.normal(kx, (B, C, H, W), jnp.float32)
    D = C * H * W

    w_packed, b_packed, b = make_params(kp, D)
    class_map = make_class_maps()                              # (4, 8) int32
    class_map_f32 = class_map.reshape(1, PACKED).astype(jnp.float32)

    out_softmax = confidence_based_routing(x, w_packed, b_packed, class_map_f32,
                                           mode="softmax")
    out_logit = confidence_based_routing(x, w_packed, b_packed, class_map_f32,
                                         mode="logit")
    jax.block_until_ready((out_softmax, out_logit))

    ref_softmax = _reference(x, w_packed, b, class_map, "softmax")
    ref_logit = _reference(x, w_packed, b, class_map, "logit")
    assert jnp.array_equal(out_softmax, ref_softmax), (out_softmax, ref_softmax)
    assert jnp.array_equal(out_logit, ref_logit), (out_logit, ref_logit)

    print("KERNEL_OK")
</pallas_src>

<mosaic_0001>
module attributes {stable_mosaic.version = 11 : i64} {
  func.func @_routing_kernel(%arg0: i32, %arg1: memref<8x1024xf32, #tpu.memory_space<vmem>>, %arg2: memref<1024x32xbf16, #tpu.memory_space<vmem>>, %arg3: memref<1x32xf32, #tpu.memory_space<vmem>>, %arg4: memref<1x32xf32, #tpu.memory_space<vmem>>, %arg5: memref<8x1xi32, #tpu.memory_space<vmem>>) attributes {dimension_semantics = [#tpu.dimension_semantics<parallel>], iteration_bounds = array<i64: 1>, scalar_prefetch = 0 : i64, scratch_operands = 0 : i64, tpu.core_type = #tpu.core_type<tc>, window_params = [{transform_indices = @transform_0, window_bounds = array<i64: 8, 1024>}, {pipeline_mode = #tpu.pipeline_mode<synchronous>, transform_indices = @transform_1, window_bounds = array<i64: 1024, 32>}, {pipeline_mode = #tpu.pipeline_mode<synchronous>, transform_indices = @transform_2, window_bounds = array<i64: 1, 32>}, {pipeline_mode = #tpu.pipeline_mode<synchronous>, transform_indices = @transform_3, window_bounds = array<i64: 1, 32>}, {transform_indices = @transform_4, window_bounds = array<i64: 8, 1>}]} {
    %c0 = arith.constant 0 : index
    %c0_0 = arith.constant 0 : index
    %0 = vector.load %arg1[%c0, %c0_0] : memref<8x1024xf32, #tpu.memory_space<vmem>>, vector<8x1024xf32>
    %1 = arith.truncf %0 : vector<8x1024xf32> to vector<8x1024xbf16>
    %c0_1 = arith.constant 0 : index
    %c0_2 = arith.constant 0 : index
    %2 = vector.load %arg2[%c0_1, %c0_2] : memref<1024x32xbf16, #tpu.memory_space<vmem>>, vector<1024x32xbf16>
    %cst = arith.constant dense<0.000000e+00> : vector<8x32xf32>
    %3 = tpu.matmul %1, %2, %cst {dimension_numbers = #tpu.dot_dimension_numbers<[1], [0], [0], [1], [0, 0, 1, 1], [], []>} : vector<8x1024xbf16>, vector<1024x32xbf16>, vector<8x32xf32> -> vector<8x32xf32>
    %c0_3 = arith.constant 0 : index
    %c0_4 = arith.constant 0 : index
    %4 = vector.load %arg3[%c0_3, %c0_4] : memref<1x32xf32, #tpu.memory_space<vmem>>, vector<1x32xf32>
    %5 = vector.broadcast %4 : vector<1x32xf32> to vector<8x32xf32>
    %6 = arith.addf %3, %5 : vector<8x32xf32>
    %7 = tpu.iota {dimensions = array<i32: 1>} : vector<8x32xi32>
    %8 = arith.sitofp %7 : vector<8x32xi32> to vector<8x32xf32>
    %c0_i32 = arith.constant 0 : i32
    %9 = vector.broadcast %c0_i32 : i32 to vector<8x32xi32>
    %10 = arith.cmpi sge, %7, %9 : vector<8x32xi32>
    %c8_i32 = arith.constant 8 : i32
    %11 = vector.broadcast %c8_i32 : i32 to vector<8x32xi32>
    %12 = arith.cmpi slt, %7, %11 : vector<8x32xi32>
    %13 = arith.andi %10, %12 : vector<8x32xi1>
    %cst_5 = arith.constant -1.000000e+30 : f32
    %14 = vector.broadcast %cst_5 : f32 to vector<8x32xf32>
    %15 = arith.select %13, %6, %14 : vector<8x32xi1>, vector<8x32xf32>
    %cst_6 = arith.constant dense<0xFF800000> : vector<8xf32>
    %16 = vector.multi_reduction <maximumf>, %15, %cst_6 [1] : vector<8x32xf32> to vector<8xf32>
    %17 = vector.shape_cast %16 : vector<8xf32> to vector<8x1xf32>
    %18 = vector.broadcast %17 : vector<8x1xf32> to vector<8x32xf32>
    %19 = arith.cmpf oge, %15, %18 : vector<8x32xf32>
    %cst_7 = arith.constant 3.200000e+01 : f32
    %20 = vector.broadcast %cst_7 : f32 to vector<8x32xf32>
    %21 = arith.select %19, %8, %20 : vector<8x32xi1>, vector<8x32xf32>
    %cst_8 = arith.constant dense<0x7F800000> : vector<8xf32>
    %22 = vector.multi_reduction <minimumf>, %21, %cst_8 [1] : vector<8x32xf32> to vector<8xf32>
    %23 = vector.shape_cast %22 : vector<8xf32> to vector<8x1xf32>
    %24 = vector.broadcast %17 : vector<8x1xf32> to vector<8x32xf32>
    %25 = arith.subf %6, %24 : vector<8x32xf32>
    %cst_9 = arith.constant -1.000000e+30 : f32
    %26 = vector.broadcast %cst_9 : f32 to vector<8x32xf32>
    %27 = arith.select %13, %25, %26 : vector<8x32xi1>, vector<8x32xf32>
    %28 = math.exp %27 : vector<8x32xf32>
    %cst_10 = arith.constant dense<0.000000e+00> : vector<8xf32>
    %29 = vector.multi_reduction <add>, %28, %cst_10 [1] : vector<8x32xf32> to vector<8xf32>
    %30 = vector.shape_cast %29 : vector<8xf32> to vector<8x1xf32>
    %cst_11 = arith.constant 0.000000e+00 : f32
    %31 = vector.broadcast %cst_11 : f32 to vector<8x1xf32>
    %32 = arith.subf %31, %30 : vector<8x1xf32>
    %c8_i32_12 = arith.constant 8 : i32
    %33 = vector.broadcast %c8_i32_12 : i32 to vector<8x32xi32>
    %34 = arith.cmpi sge, %7, %33 : vector<8x32xi32>
    %c16_i32 = arith.constant 16 : i32
    %35 = vector.broadcast %c16_i32 : i32 to vector<8x32xi32>
    %36 = arith.cmpi slt, %7, %35 : vector<8x32xi32>
    %37 = arith.andi %34, %36 : vector<8x32xi1>
    %cst_13 = arith.constant -1.000000e+30 : f32
    %38 = vector.broadcast %cst_13 : f32 to vector<8x32xf32>
    %39 = arith.select %37, %6, %38 : vector<8x32xi1>, vector<8x32xf32>
    %cst_14 = arith.constant dense<0xFF800000> : vector<8xf32>
    %40 = vector.multi_reduction <maximumf>, %39, %cst_14 [1] : vector<8x32xf32> to vector<8xf32>
    %41 = vector.shape_cast %40 : vector<8xf32> to vector<8x1xf32>
    %42 = vector.broadcast %41 : vector<8x1xf32> to vector<8x32xf32>
    %43 = arith.cmpf oge, %39, %42 : vector<8x32xf32>
    %cst_15 = arith.constant 3.200000e+01 : f32
    %44 = vector.broadcast %cst_15 : f32 to vector<8x32xf32>
    %45 = arith.select %43, %8, %44 : vector<8x32xi1>, vector<8x32xf32>
    %cst_16 = arith.constant dense<0x7F800000> : vector<8xf32>
    %46 = vector.multi_reduction <minimumf>, %45, %cst_16 [1] : vector<8x32xf32> to vector<8xf32>
    %47 = vector.shape_cast %46 : vector<8xf32> to vector<8x1xf32>
    %48 = vector.broadcast %41 : vector<8x1xf32> to vector<8x32xf32>
    %49 = arith.subf %6, %48 : vector<8x32xf32>
    %cst_17 = arith.constant -1.000000e+30 : f32
    %50 = vector.broadcast %cst_17 : f32 to vector<8x32xf32>
    %51 = arith.select %37, %49, %50 : vector<8x32xi1>, vector<8x32xf32>
    %52 = math.exp %51 : vector<8x32xf32>
    %cst_18 = arith.constant dense<0.000000e+00> : vector<8xf32>
    %53 = vector.multi_reduction <add>, %52, %cst_18 [1] : vector<8x32xf32> to vector<8xf32>
    %54 = vector.shape_cast %53 : vector<8xf32> to vector<8x1xf32>
    %cst_19 = arith.constant 0.000000e+00 : f32
    %55 = vector.broadcast %cst_19 : f32 to vector<8x1xf32>
    %56 = arith.subf %55, %54 : vector<8x1xf32>
    %57 = arith.cmpf ogt, %56, %32 : vector<8x1xf32>
    %58 = arith.select %57, %56, %32 : vector<8x1xi1>, vector<8x1xf32>
    %59 = arith.select %57, %47, %23 : vector<8x1xi1>, vector<8x1xf32>
    %c16_i32_20 = arith.constant 16 : i32
    %60 = vector.broadcast %c16_i32_20 : i32 to vector<8x32xi32>
    %61 = arith.cmpi sge, %7, %60 : vector<8x32xi32>
    %c24_i32 = arith.constant 24 : i32
    %62 = vector.broadcast %c24_i32 : i32 to vector<8x32xi32>
    %63 = arith.cmpi slt, %7, %62 : vector<8x32xi32>
    %64 = arith.andi %61, %63 : vector<8x32xi1>
    %cst_21 = arith.constant -1.000000e+30 : f32
    %65 = vector.broadcast %cst_21 : f32 to vector<8x32xf32>
    %66 = arith.select %64, %6, %65 : vector<8x32xi1>, vector<8x32xf32>
    %cst_22 = arith.constant dense<0xFF800000> : vector<8xf32>
    %67 = vector.multi_reduction <maximumf>, %66, %cst_22 [1] : vector<8x32xf32> to vector<8xf32>
    %68 = vector.shape_cast %67 : vector<8xf32> to vector<8x1xf32>
    %69 = vector.broadcast %68 : vector<8x1xf32> to vector<8x32xf32>
    %70 = arith.cmpf oge, %66, %69 : vector<8x32xf32>
    %cst_23 = arith.constant 3.200000e+01 : f32
    %71 = vector.broadcast %cst_23 : f32 to vector<8x32xf32>
    %72 = arith.select %70, %8, %71 : vector<8x32xi1>, vector<8x32xf32>
    %cst_24 = arith.constant dense<0x7F800000> : vector<8xf32>
    %73 = vector.multi_reduction <minimumf>, %72, %cst_24 [1] : vector<8x32xf32> to vector<8xf32>
    %74 = vector.shape_cast %73 : vector<8xf32> to vector<8x1xf32>
    %75 = vector.broadcast %68 : vector<8x1xf32> to vector<8x32xf32>
    %76 = arith.subf %6, %75 : vector<8x32xf32>
    %cst_25 = arith.constant -1.000000e+30 : f32
    %77 = vector.broadcast %cst_25 : f32 to vector<8x32xf32>
    %78 = arith.select %64, %76, %77 : vector<8x32xi1>, vector<8x32xf32>
    %79 = math.exp %78 : vector<8x32xf32>
    %cst_26 = arith.constant dense<0.000000e+00> : vector<8xf32>
    %80 = vector.multi_reduction <add>, %79, %cst_26 [1] : vector<8x32xf32> to vector<8xf32>
    %81 = vector.shape_cast %80 : vector<8xf32> to vector<8x1xf32>
    %cst_27 = arith.constant 0.000000e+00 : f32
    %82 = vector.broadcast %cst_27 : f32 to vector<8x1xf32>
    %83 = arith.subf %82, %81 : vector<8x1xf32>
    %84 = arith.cmpf ogt, %83, %58 : vector<8x1xf32>
    %85 = arith.select %84, %83, %58 : vector<8x1xi1>, vector<8x1xf32>
    %86 = arith.select %84, %74, %59 : vector<8x1xi1>, vector<8x1xf32>
    %c24_i32_28 = arith.constant 24 : i32
    %87 = vector.broadcast %c24_i32_28 : i32 to vector<8x32xi32>
    %88 = arith.cmpi sge, %7, %87 : vector<8x32xi32>
    %c32_i32 = arith.constant 32 : i32
    %89 = vector.broadcast %c32_i32 : i32 to vector<8x32xi32>
    %90 = arith.cmpi slt, %7, %89 : vector<8x32xi32>
    %91 = arith.andi %88, %90 : vector<8x32xi1>
    %cst_29 = arith.constant -1.000000e+30 : f32
    %92 = vector.broadcast %cst_29 : f32 to vector<8x32xf32>
    %93 = arith.select %91, %6, %92 : vector<8x32xi1>, vector<8x32xf32>
    %cst_30 = arith.constant dense<0xFF800000> : vector<8xf32>
    %94 = vector.multi_reduction <maximumf>, %93, %cst_30 [1] : vector<8x32xf32> to vector<8xf32>
    %95 = vector.shape_cast %94 : vector<8xf32> to vector<8x1xf32>
    %96 = vector.broadcast %95 : vector<8x1xf32> to vector<8x32xf32>
    %97 = arith.cmpf oge, %93, %96 : vector<8x32xf32>
    %cst_31 = arith.constant 3.200000e+01 : f32
    %98 = vector.broadcast %cst_31 : f32 to vector<8x32xf32>
    %99 = arith.select %97, %8, %98 : vector<8x32xi1>, vector<8x32xf32>
    %cst_32 = arith.constant dense<0x7F800000> : vector<8xf32>
    %100 = vector.multi_reduction <minimumf>, %99, %cst_32 [1] : vector<8x32xf32> to vector<8xf32>
    %101 = vector.shape_cast %100 : vector<8xf32> to vector<8x1xf32>
    %102 = vector.broadcast %95 : vector<8x1xf32> to vector<8x32xf32>
    %103 = arith.subf %6, %102 : vector<8x32xf32>
    %cst_33 = arith.constant -1.000000e+30 : f32
    %104 = vector.broadcast %cst_33 : f32 to vector<8x32xf32>
    %105 = arith.select %91, %103, %104 : vector<8x32xi1>, vector<8x32xf32>
    %106 = math.exp %105 : vector<8x32xf32>
    %cst_34 = arith.constant dense<0.000000e+00> : vector<8xf32>
    %107 = vector.multi_reduction <add>, %106, %cst_34 [1] : vector<8x32xf32> to vector<8xf32>
    %108 = vector.shape_cast %107 : vector<8xf32> to vector<8x1xf32>
    %cst_35 = arith.constant 0.000000e+00 : f32
    %109 = vector.broadcast %cst_35 : f32 to vector<8x1xf32>
    %110 = arith.subf %109, %108 : vector<8x1xf32>
    %111 = arith.cmpf ogt, %110, %85 : vector<8x1xf32>
    %112 = arith.select %111, %101, %86 : vector<8x1xi1>, vector<8x1xf32>
    %113 = arith.fptosi %112 : vector<8x1xf32> to vector<8x1xi32>
    %114 = vector.broadcast %113 : vector<8x1xi32> to vector<8x32xi32>
    %115 = arith.cmpi eq, %7, %114 : vector<8x32xi32>
    %c0_36 = arith.constant 0 : index
    %c0_37 = arith.constant 0 : index
    %116 = vector.load %arg4[%c0_36, %c0_37] : memref<1x32xf32, #tpu.memory_space<vmem>>, vector<1x32xf32>
    %cst_38 = arith.constant 0.000000e+00 : f32
    %117 = vector.shape_cast %116 : vector<1x32xf32> to vector<1x32xf32>
    %118 = vector.broadcast %117 : vector<1x32xf32> to vector<8x32xf32>
    %119 = vector.broadcast %cst_38 : f32 to vector<8x32xf32>
    %120 = arith.select %115, %118, %119 : vector<8x32xi1>, vector<8x32xf32>
    %cst_39 = arith.constant dense<0.000000e+00> : vector<8xf32>
    %121 = vector.multi_reduction <add>, %120, %cst_39 [1] : vector<8x32xf32> to vector<8xf32>
    %122 = vector.shape_cast %121 : vector<8xf32> to vector<8x1xf32>
    %123 = arith.fptosi %122 : vector<8x1xf32> to vector<8x1xi32>
    %c0_40 = arith.constant 0 : index
    %c0_41 = arith.constant 0 : index
    %124 = vector.load %arg5[%c0_40, %c0_41] : memref<8x1xi32, #tpu.memory_space<vmem>>, vector<8x1xi32>
    tpu.vector_store %arg5[%c0_40, %c0_41], %123 {strides = array<i32>} : memref<8x1xi32, #tpu.memory_space<vmem>>, vector<8x1xi32>,
    return
  }
  func.func @transform_0(%arg0: i32) -> (i32, i32) {
    %c0_i32 = arith.constant 0 : i32
    %c0_i32_0 = arith.constant 0 : i32
    return %arg0, %c0_i32 : i32, i32
  }
  func.func @transform_1(%arg0: i32) -> (i32, i32) {
    %c0_i32 = arith.constant 0 : i32
    %c0_i32_0 = arith.constant 0 : i32
    %c0_i32_1 = arith.constant 0 : i32
    return %c0_i32, %c0_i32_0 : i32, i32
  }
  func.func @transform_2(%arg0: i32) -> (i32, i32) {
    %c0_i32 = arith.constant 0 : i32
    %c0_i32_0 = arith.constant 0 : i32
    %c0_i32_1 = arith.constant 0 : i32
    return %c0_i32, %c0_i32_0 : i32, i32
  }
  func.func @transform_3(%arg0: i32) -> (i32, i32) {
    %c0_i32 = arith.constant 0 : i32
    %c0_i32_0 = arith.constant 0 : i32
    %c0_i32_1 = arith.constant 0 : i32
    return %c0_i32, %c0_i32_0 : i32, i32
  }
  func.func @transform_4(%arg0: i32) -> (i32, i32) {
    %c0_i32 = arith.constant 0 : i32
    %c0_i32_0 = arith.constant 0 : i32
    return %arg0, %c0_i32 : i32, i32
  }
}

</mosaic_0001>

<llo_original>
// kernel: confidence_based_routing.1
$region0: #{confidence_based_routing.1}
  #allocation0 [shape = 'u32[]', space=smem, size = 0x4, offset = 0x4, fixed_abs, tag = 'smem constant byte address 0x4 - core index']
  #allocation1 [shape = 'u32[72,128]{1,0:T(1,128)}', space=vmem, size = 0x9000, scoped, tag = 'internal scratch']
  %s0 = inlined_call_operand.vmem [shape: f32[8,1024], index: 0, kind: input, shape index: {}]
  %s1 = inlined_call_operand.vmem [shape: bf16[1024,32], index: 1, kind: input, shape index: {}]
  %s2 = inlined_call_operand.vmem [shape: f32[1,32], index: 2, kind: input, shape index: {}]
  %s3 = inlined_call_operand.vmem [shape: f32[1,32], index: 3, kind: input, shape index: {}]
  %s4 = inlined_call_operand.vmem [shape: s32[8,1], index: 4, kind: output, shape index: {}]
  %s5 = sld [smem:[#allocation0]]
  $region26: #{confidence_based_routing.1} parent=0
    _
  %s7 = ssub.s32 1, %s5
  %s8 = scalar_select 0, %s7, %s5
  // Predicated region
  $region2: #{confidence_based_routing.1} parent=0 // pred_check
    _
  $region3: #{confidence_based_routing.1} parent=0 // pred_check_branch
    %10 = sbr.rel (0) target = $region5
  $region4: #{confidence_based_routing.1} parent=0 // pred_region
    _
  $region5: #{confidence_based_routing.1} parent=0 // pred_fallthru
    _
  // Predicated region
  $region6: #{confidence_based_routing.1} parent=0 // pred_check
    _
  $region7: #{confidence_based_routing.1} parent=0 // pred_check_branch
    %12 = sbr.rel (0) target = $region9
  $region8: #{confidence_based_routing.1} parent=0 // pred_region
    _
  $region9: #{confidence_based_routing.1} parent=0 // pred_fallthru
    _
  // Predicated region
  $region10: #{confidence_based_routing.1} parent=0 // pred_check
    _
  $region11: #{confidence_based_routing.1} parent=0 // pred_check_branch
    %14 = sbr.rel (0) target = $region13
  $region12: #{confidence_based_routing.1} parent=0 // pred_region
    _
  $region13: #{confidence_based_routing.1} parent=0 // pred_fallthru
    _
  // Predicated region
  $region14: #{confidence_based_routing.1} parent=0 // pred_check
    _
  $region15: #{confidence_based_routing.1} parent=0 // pred_check_branch
    %16 = sbr.rel (0) target = $region17
  $region16: #{confidence_based_routing.1} parent=0 // pred_region
    _
  $region17: #{confidence_based_routing.1} parent=0 // pred_fallthru
    _
  %v17 = vld [vmem:[%s0] sm:$0xff]
  %v18 = vld [vmem:[%s0 + $0x8] sm:$0xff]
  %v19 = vld [vmem:[%s0 + $0x10] sm:$0xff]
  %v20 = vld [vmem:[%s0 + $0x18] sm:$0xff]
  %v21 = vld [vmem:[%s0 + $0x20] sm:$0xff]
  %v22 = vld [vmem:[%s0 + $0x28] sm:$0xff]
  %v23 = vld [vmem:[%s0 + $0x30] sm:$0xff]
  %v24 = vld [vmem:[%s0 + $0x38] sm:$0xff]
  %v25 = vpack.c.bf16 %v17, %v17
  %v26 = vpack.c.bf16 %v18, %v18
  %v27 = vpack.c.bf16 %v19, %v19
  %v28 = vpack.c.bf16 %v20, %v20
  %v29 = vpack.c.bf16 %v21, %v21
  %v30 = vpack.c.bf16 %v22, %v22
  %v31 = vpack.c.bf16 %v23, %v23
  %v32 = vpack.c.bf16 %v24, %v24
  %v33 = vld [vmem:[%s1] sm:$0xf]
  %v34 = vld [vmem:[%s1 + $0x4] sm:$0xf]
  %v35 = vld [vmem:[%s1 + $0x8] sm:$0xf]
  %v36 = vld [vmem:[%s1 + $0xc] sm:$0xf]
  %v37 = vld [vmem:[%s1 + $0x10] sm:$0xf]
  %v38 = vld [vmem:[%s1 + $0x14] sm:$0xf]
  %v39 = vld [vmem:[%s1 + $0x18] sm:$0xf]
  %v40 = vld [vmem:[%s1 + $0x1c] sm:$0xf]
  %v41 = vld [vmem:[%s1 + $0x20] sm:$0xf]
  %v42 = vld [vmem:[%s1 + $0x24] sm:$0xf]
  %v43 = vld [vmem:[%s1 + $0x28] sm:$0xf]
  %v44 = vld [vmem:[%s1 + $0x2c] sm:$0xf]
  %v45 = vld [vmem:[%s1 + $0x30] sm:$0xf]
  %v46 = vld [vmem:[%s1 + $0x34] sm:$0xf]
  %v47 = vld [vmem:[%s1 + $0x38] sm:$0xf]
  %v48 = vld [vmem:[%s1 + $0x3c] sm:$0xf]
  %v49 = vld [vmem:[%s1 + $0x40] sm:$0xf]
  %v50 = vld [vmem:[%s1 + $0x44] sm:$0xf]
  %v51 = vld [vmem:[%s1 + $0x48] sm:$0xf]
  %v52 = vld [vmem:[%s1 + $0x4c] sm:$0xf]
  %v53 = vld [vmem:[%s1 + $0x50] sm:$0xf]
  %v54 = vld [vmem:[%s1 + $0x54] sm:$0xf]
  %v55 = vld [vmem:[%s1 + $0x58] sm:$0xf]
  %v56 = vld [vmem:[%s1 + $0x5c] sm:$0xf]
  %v57 = vld [vmem:[%s1 + $0x60] sm:$0xf]
  %v58 = vld [vmem:[%s1 + $0x64] sm:$0xf]
  %v59 = vld [vmem:[%s1 + $0x68] sm:$0xf]
  %v60 = vld [vmem:[%s1 + $0x6c] sm:$0xf]
  %v61 = vld [vmem:[%s1 + $0x70] sm:$0xf]
  %v62 = vld [vmem:[%s1 + $0x74] sm:$0xf]
  %v63 = vld [vmem:[%s1 + $0x78] sm:$0xf]
  %v64 = vld [vmem:[%s1 + $0x7c] sm:$0xf]
  %v65 = vld [vmem:[%s1 + $0x80] sm:$0xf]
  %v66 = vld [vmem:[%s1 + $0x84] sm:$0xf]
  %v67 = vld [vmem:[%s1 + $0x88] sm:$0xf]
  %v68 = vld [vmem:[%s1 + $0x8c] sm:$0xf]
  %v69 = vld [vmem:[%s1 + $0x90] sm:$0xf]
  %v70 = vld [vmem:[%s1 + $0x94] sm:$0xf]
  %v71 = vld [vmem:[%s1 + $0x98] sm:$0xf]
  %v72 = vld [vmem:[%s1 + $0x9c] sm:$0xf]
  %v73 = vld [vmem:[%s1 + $0xa0] sm:$0xf]
  %v74 = vld [vmem:[%s1 + $0xa4] sm:$0xf]
  %v75 = vld [vmem:[%s1 + $0xa8] sm:$0xf]
  %v76 = vld [vmem:[%s1 + $0xac] sm:$0xf]
  %v77 = vld [vmem:[%s1 + $0xb0] sm:$0xf]
  %v78 = vld [vmem:[%s1 + $0xb4] sm:$0xf]
  %v79 = vld [vmem:[%s1 + $0xb8] sm:$0xf]
  %v80 = vld [vmem:[%s1 + $0xbc] sm:$0xf]
  %v81 = vld [vmem:[%s1 + $0xc0] sm:$0xf]
  %v82 = vld [vmem:[%s1 + $0xc4] sm:$0xf]
  %v83 = vld [vmem:[%s1 + $0xc8] sm:$0xf]
  %v84 = vld [vmem:[%s1 + $0xcc] sm:$0xf]
  %v85 = vld [vmem:[%s1 + $0xd0] sm:$0xf]
  %v86 = vld [vmem:[%s1 + $0xd4] sm:$0xf]
  %v87 = vld [vmem:[%s1 + $0xd8] sm:$0xf]
  %v88 = vld [vmem:[%s1 + $0xdc] sm:$0xf]
  %v89 = vld [vmem:[%s1 + $0xe0] sm:$0xf]
  %v90 = vld [vmem:[%s1 + $0xe4] sm:$0xf]
  %v91 = vld [vmem:[%s1 + $0xe8] sm:$0xf]
  %v92 = vld [vmem:[%s1 + $0xec] sm:$0xf]
  %v93 = vld [vmem:[%s1 + $0xf0] sm:$0xf]
  %v94 = vld [vmem:[%s1 + $0xf4] sm:$0xf]
  %v95 = vld [vmem:[%s1 + $0xf8] sm:$0xf]
  %v96 = vld [vmem:[%s1 + $0xfc] sm:$0xf]
  %v97 = vld [vmem:[%s1 + $0x100] sm:$0xf]
  %v98 = vld [vmem:[%s1 + $0x104] sm:$0xf]
  %v99 = vld [vmem:[%s1 + $0x108] sm:$0xf]
  %v100 = vld [vmem:[%s1 + $0x10c] sm:$0xf]
  %v101 = vld [vmem:[%s1 + $0x110] sm:$0xf]
  %v102 = vld [vmem:[%s1 + $0x114] sm:$0xf]
  %v103 = vld [vmem:[%s1 + $0x118] sm:$0xf]
  %v104 = vld [vmem:[%s1 + $0x11c] sm:$0xf]
  %v105 = vld [vmem:[%s1 + $0x120] sm:$0xf]
  %v106 = vld [vmem:[%s1 + $0x124] sm:$0xf]
  %v107 = vld [vmem:[%s1 + $0x128] sm:$0xf]
  %v108 = vld [vmem:[%s1 + $0x12c] sm:$0xf]
  %v109 = vld [vmem:[%s1 + $0x130] sm:$0xf]
  %v110 = vld [vmem:[%s1 + $0x134] sm:$0xf]
  %v111 = vld [vmem:[%s1 + $0x138] sm:$0xf]
  %v112 = vld [vmem:[%s1 + $0x13c] sm:$0xf]
  %v113 = vld [vmem:[%s1 + $0x140] sm:$0xf]
  %v114 = vld [vmem:[%s1 + $0x144] sm:$0xf]
  %v115 = vld [vmem:[%s1 + $0x148] sm:$0xf]
  %v116 = vld [vmem:[%s1 + $0x14c] sm:$0xf]
  %v117 = vld [vmem:[%s1 + $0x150] sm:$0xf]
  %v118 = vld [vmem:[%s1 + $0x154] sm:$0xf]
  %v119 = vld [vmem:[%s1 + $0x158] sm:$0xf]
  %v120 = vld [vmem:[%s1 + $0x15c] sm:$0xf]
  %v121 = vld [vmem:[%s1 + $0x160] sm:$0xf]
  %v122 = vld [vmem:[%s1 + $0x164] sm:$0xf]
  %v123 = vld [vmem:[%s1 + $0x168] sm:$0xf]
  %v124 = vld [vmem:[%s1 + $0x16c] sm:$0xf]
  %v125 = vld [vmem:[%s1 + $0x170] sm:$0xf]
  %v126 = vld [vmem:[%s1 + $0x174] sm:$0xf]
  %v127 = vld [vmem:[%s1 + $0x178] sm:$0xf]
  %v128 = vld [vmem:[%s1 + $0x17c] sm:$0xf]
  %v129 = vld [vmem:[%s1 + $0x180] sm:$0xf]
  %v130 = vld [vmem:[%s1 + $0x184] sm:$0xf]
  %v131 = vld [vmem:[%s1 + $0x188] sm:$0xf]
  %v132 = vld [vmem:[%s1 + $0x18c] sm:$0xf]
  %v133 = vld [vmem:[%s1 + $0x190] sm:$0xf]
  %v134 = vld [vmem:[%s1 + $0x194] sm:$0xf]
  %v135 = vld [vmem:[%s1 + $0x198] sm:$0xf]
  %v136 = vld [vmem:[%s1 + $0x19c] sm:$0xf]
  %v137 = vld [vmem:[%s1 + $0x1a0] sm:$0xf]
  %v138 = vld [vmem:[%s1 + $0x1a4] sm:$0xf]
  %v139 = vld [vmem:[%s1 + $0x1a8] sm:$0xf]
  %v140 = vld [vmem:[%s1 + $0x1ac] sm:$0xf]
  %v141 = vld [vmem:[%s1 + $0x1b0] sm:$0xf]
  %v142 = vld [vmem:[%s1 + $0x1b4] sm:$0xf]
  %v143 = vld [vmem:[%s1 + $0x1b8] sm:$0xf]
  %v144 = vld [vmem:[%s1 + $0x1bc] sm:$0xf]
  %v145 = vld [vmem:[%s1 + $0x1c0] sm:$0xf]
  %v146 = vld [vmem:[%s1 + $0x1c4] sm:$0xf]
  %v147 = vld [vmem:[%s1 + $0x1c8] sm:$0xf]
  %v148 = vld [vmem:[%s1 + $0x1cc] sm:$0xf]
  %v149 = vld [vmem:[%s1 + $0x1d0] sm:$0xf]
  %v150 = vld [vmem:[%s1 + $0x1d4] sm:$0xf]
  %v151 = vld [vmem:[%s1 + $0x1d8] sm:$0xf]
  %v152 = vld [vmem:[%s1 + $0x1dc] sm:$0xf]
  %v153 = vld [vmem:[%s1 + $0x1e0] sm:$0xf]
  %v154 = vld [vmem:[%s1 + $0x1e4] sm:$0xf]
  %v155 = vld [vmem:[%s1 + $0x1e8] sm:$0xf]
  %v156 = vld [vmem:[%s1 + $0x1ec] sm:$0xf]
  %v157 = vld [vmem:[%s1 + $0x1f0] sm:$0xf]
  %v158 = vld [vmem:[%s1 + $0x1f4] sm:$0xf]
  %v159 = vld [vmem:[%s1 + $0x1f8] sm:$0xf]
  %v160 = vld [vmem:[%s1 + $0x1fc] sm:$0xf]
  %v161 = vld [vmem:[%s2] sm:$0x1]
  %v163 = vperm.slane %v161, 0
  %v293 = vunpack.c.l.b16 %v33
  %v294 = vunpack.c.l.b16 %v34
  %v295 = vunpack.c.l.b16 %v35
  %v296 = vunpack.c.l.b16 %v36
  %v297 = vunpack.c.l.b16 %v37
  %v298 = vunpack.c.l.b16 %v38
  %v299 = vunpack.c.l.b16 %v39
  %v300 = vunpack.c.l.b16 %v40
  %v301 = vunpack.c.l.b16 %v41
  %v302 = vunpack.c.l.b16 %v42
  %v303 = vunpack.c.l.b16 %v43
  %v304 = vunpack.c.l.b16 %v44
  %v305 = vunpack.c.l.b16 %v45
  %v306 = vunpack.c.l.b16 %v46
  %v307 = vunpack.c.l.b16 %v47
  %v308 = vunpack.c.l.b16 %v48
  %v309 = vunpack.c.l.b16 %v49
  %v310 = vunpack.c.l.b16 %v50
  %v311 = vunpack.c.l.b16 %v51
  %v312 = vunpack.c.l.b16 %v52
  %v313 = vunpack.c.l.b16 %v53
  %v314 = vunpack.c.l.b16 %v54
  %v315 = vunpack.c.l.b16 %v55
  %v316 = vunpack.c.l.b16 %v56
  %v317 = vunpack.c.l.b16 %v57
  %v318 = vunpack.c.l.b16 %v58
  %v319 = vunpack.c.l.b16 %v59
  %v320 = vunpack.c.l.b16 %v60
  %v321 = vunpack.c.l.b16 %v61
  %v322 = vunpack.c.l.b16 %v62
  %v323 = vunpack.c.l.b16 %v63
  %v324 = vunpack.c.l.b16 %v64
  %v325 = vunpack.c.l.b16 %v65
  %v326 = vunpack.c.l.b16 %v66
  %v327 = vunpack.c.l.b16 %v67
  %v328 = vunpack.c.l.b16 %v68
  %v329 = vunpack.c.l.b16 %v69
  %v330 = vunpack.c.l.b16 %v70
  %v331 = vunpack.c.l.b16 %v71
  %v332 = vunpack.c.l.b16 %v72
  %v333 = vunpack.c.l.b16 %v73
  %v334 = vunpack.c.l.b16 %v74
  %v335 = vunpack.c.l.b16 %v75
  %v336 = vunpack.c.l.b16 %v76
  %v337 = vunpack.c.l.b16 %v77
  %v338 = vunpack.c.l.b16 %v78
  %v339 = vunpack.c.l.b16 %v79
  %v340 = vunpack.c.l.b16 %v80
  %v341 = vunpack.c.l.b16 %v81
  %v342 = vunpack.c.l.b16 %v82
  %v343 = vunpack.c.l.b16 %v83
  %v344 = vunpack.c.l.b16 %v84
  %v345 = vunpack.c.l.b16 %v85
  %v346 = vunpack.c.l.b16 %v86
  %v347 = vunpack.c.l.b16 %v87
  %v348 = vunpack.c.l.b16 %v88
  %v349 = vunpack.c.l.b16 %v89
  %v350 = vunpack.c.l.b16 %v90
  %v351 = vunpack.c.l.b16 %v91
  %v352 = vunpack.c.l.b16 %v92
  %v353 = vunpack.c.l.b16 %v93
  %v354 = vunpack.c.l.b16 %v94
  %v355 = vunpack.c.l.b16 %v95
  %v356 = vunpack.c.l.b16 %v96
  %v357 = vunpack.c.l.b16 %v97
  %v358 = vunpack.c.l.b16 %v98
  %v359 = vunpack.c.l.b16 %v99
  %v360 = vunpack.c.l.b16 %v100
  %v361 = vunpack.c.l.b16 %v101
  %v362 = vunpack.c.l.b16 %v102
  %v363 = vunpack.c.l.b16 %v103
  %v364 = vunpack.c.l.b16 %v104
  %v365 = vunpack.c.l.b16 %v105
  %v366 = vunpack.c.l.b16 %v106
  %v367 = vunpack.c.l.b16 %v107
  %v368 = vunpack.c.l.b16 %v108
  %v369 = vunpack.c.l.b16 %v109
  %v370 = vunpack.c.l.b16 %v110
  %v371 = vunpack.c.l.b16 %v111
  %v372 = vunpack.c.l.b16 %v112
  %v373 = vunpack.c.l.b16 %v113
  %v374 = vunpack.c.l.b16 %v114
  %v375 = vunpack.c.l.b16 %v115
  %v376 = vunpack.c.l.b16 %v116
  %v377 = vunpack.c.l.b16 %v117
  %v378 = vunpack.c.l.b16 %v118
  %v379 = vunpack.c.l.b16 %v119
  %v380 = vunpack.c.l.b16 %v120
  %v381 = vunpack.c.l.b16 %v121
  %v382 = vunpack.c.l.b16 %v122
  %v383 = vunpack.c.l.b16 %v123
  %v384 = vunpack.c.l.b16 %v124
  %v385 = vunpack.c.l.b16 %v125
  %v386 = vunpack.c.l.b16 %v126
  %v387 = vunpack.c.l.b16 %v127
  %v388 = vunpack.c.l.b16 %v128
  %v389 = vunpack.c.l.b16 %v129
  %v390 = vunpack.c.l.b16 %v130
  %v391 = vunpack.c.l.b16 %v131
  %v392 = vunpack.c.l.b16 %v132
  %v393 = vunpack.c.l.b16 %v133
  %v394 = vunpack.c.l.b16 %v134
  %v395 = vunpack.c.l.b16 %v135
  %v396 = vunpack.c.l.b16 %v136
  %v397 = vunpack.c.l.b16 %v137
  %v398 = vunpack.c.l.b16 %v138
  %v399 = vunpack.c.l.b16 %v139
  %v400 = vunpack.c.l.b16 %v140
  %v401 = vunpack.c.l.b16 %v141
  %v402 = vunpack.c.l.b16 %v142
  %v403 = vunpack.c.l.b16 %v143
  %v404 = vunpack.c.l.b16 %v144
  %v405 = vunpack.c.l.b16 %v145
  %v406 = vunpack.c.l.b16 %v146
  %v407 = vunpack.c.l.b16 %v147
  %v408 = vunpack.c.l.b16 %v148
  %v409 = vunpack.c.l.b16 %v149
  %v410 = vunpack.c.l.b16 %v150
  %v411 = vunpack.c.l.b16 %v151
  %v412 = vunpack.c.l.b16 %v152
  %v413 = vunpack.c.l.b16 %v153
  %v414 = vunpack.c.l.b16 %v154
  %v415 = vunpack.c.l.b16 %v155
  %v416 = vunpack.c.l.b16 %v156
  %v417 = vunpack.c.l.b16 %v157
  %v418 = vunpack.c.l.b16 %v158
  %v419 = vunpack.c.l.b16 %v159
  %v420 = vunpack.c.l.b16 %v160
  %v421 = vpack.c.b16 %v294, %v293
  %v422 = vpack.c.b16 %v296, %v295
  %v423 = vpack.c.b16 %v298, %v297
  %v424 = vpack.c.b16 %v300, %v299
  %v425 = vpack.c.b16 %v302, %v301
  %v426 = vpack.c.b16 %v304, %v303
  %v427 = vpack.c.b16 %v306, %v305
  %v428 = vpack.c.b16 %v308, %v307
  %v429 = vpack.c.b16 %v310, %v309
  %v430 = vpack.c.b16 %v312, %v311
  %v431 = vpack.c.b16 %v314, %v313
  %v432 = vpack.c.b16 %v316, %v315
  %v433 = vpack.c.b16 %v318, %v317
  %v434 = vpack.c.b16 %v320, %v319
  %v435 = vpack.c.b16 %v322, %v321
  %v436 = vpack.c.b16 %v324, %v323
  %v437 = vpack.c.b16 %v326, %v325
  %v438 = vpack.c.b16 %v328, %v327
  %v439 = vpack.c.b16 %v330, %v329
  %v440 = vpack.c.b16 %v332, %v331
  %v441 = vpack.c.b16 %v334, %v333
  %v442 = vpack.c.b16 %v336, %v335
  %v443 = vpack.c.b16 %v338, %v337
  %v444 = vpack.c.b16 %v340, %v339
  %v445 = vpack.c.b16 %v342, %v341
  %v446 = vpack.c.b16 %v344, %v343
  %v447 = vpack.c.b16 %v346, %v345
  %v448 = vpack.c.b16 %v348, %v347
  %v449 = vpack.c.b16 %v350, %v349
  %v450 = vpack.c.b16 %v352, %v351
  %v451 = vpack.c.b16 %v354, %v353
  %v452 = vpack.c.b16 %v356, %v355
  %v453 = vpack.c.b16 %v358, %v357
  %v454 = vpack.c.b16 %v360, %v359
  %v455 = vpack.c.b16 %v362, %v361
  %v456 = vpack.c.b16 %v364, %v363
  %v457 = vpack.c.b16 %v366, %v365
  %v458 = vpack.c.b16 %v368, %v367
  %v459 = vpack.c.b16 %v370, %v369
  %v460 = vpack.c.b16 %v372, %v371
  %v461 = vpack.c.b16 %v374, %v373
  %v462 = vpack.c.b16 %v376, %v375
  %v463 = vpack.c.b16 %v378, %v377
  %v464 = vpack.c.b16 %v380, %v379
  %v465 = vpack.c.b16 %v382, %v381
  %v466 = vpack.c.b16 %v384, %v383
  %v467 = vpack.c.b16 %v386, %v385
  %v468 = vpack.c.b16 %v388, %v387
  %v469 = vpack.c.b16 %v390, %v389
  %v470 = vpack.c.b16 %v392, %v391
  %v471 = vpack.c.b16 %v394, %v393
  %v472 = vpack.c.b16 %v396, %v395
  %v473 = vpack.c.b16 %v398, %v397
  %v474 = vpack.c.b16 %v400, %v399
  %v475 = vpack.c.b16 %v402, %v401
  %v476 = vpack.c.b16 %v404, %v403
  %v477 = vpack.c.b16 %v406, %v405
  %v478 = vpack.c.b16 %v408, %v407
  %v479 = vpack.c.b16 %v410, %v409
  %v480 = vpack.c.b16 %v412, %v411
  %v481 = vpack.c.b16 %v414, %v413
  %v482 = vpack.c.b16 %v416, %v415
  %v483 = vpack.c.b16 %v418, %v417
  %v484 = vpack.c.b16 %v420, %v419
  %549 = vmatpush.bf16.msra.mxu0 %v428
  %550 = vmatpush.bf16.msra.mxu0 %v427
  %551 = vmatpush.bf16.msra.mxu0 %v426
  %552 = vmatpush.bf16.msra.mxu0 %v425
  %553 = vmatpush.bf16.msra.mxu0 %v424
  %554 = vmatpush.bf16.msra.mxu0 %v423
  %555 = vmatpush.bf16.msra.mxu0 %v422
  %556 = vmatpush.bf16.msra.mxu0 %v421
  %557 = vmatmul.bf16.gmra.mxu0 %v25
  %v558 = vpop.f32.mrf.mxu0
  %v559 = vadd.f32 %v163, %v558
  %v560 = vpop.f32.mrf.mxu0
  %561 = vdwg.mxu0
  %562 = vmatpush.bf16.msra.mxu0 %v436
  %563 = vmatpush.bf16.msra.mxu0 %v435
  %564 = vmatpush.bf16.msra.mxu0 %v434
  %565 = vmatpush.bf16.msra.mxu0 %v433
  %566 = vmatpush.bf16.msra.mxu0 %v432
  %567 = vmatpush.bf16.msra.mxu0 %v431
  %568 = vmatpush.bf16.msra.mxu0 %v430
  %569 = vmatpush.bf16.msra.mxu0 %v429
  %570 = vmatmul.bf16.gmra.mxu0 %v26
  %v571 = vpop.f32.mrf.mxu0
  %v572 = vadd.f32 %v559, %v571
  %v573 = vpop.f32.mrf.mxu0
  %574 = vdwg.mxu0
  %575 = vmatpush.bf16.msra.mxu0 %v444
  %576 = vmatpush.bf16.msra.mxu0 %v443
  %577 = vmatpush.bf16.msra.mxu0 %v442
  %578 = vmatpush.bf16.msra.mxu0 %v441
  %579 = vmatpush.bf16.msra.mxu0 %v440
  %580 = vmatpush.bf16.msra.mxu0 %v439
  %581 = vmatpush.bf16.msra.mxu0 %v438
  %582 = vmatpush.bf16.msra.mxu0 %v437
  %583 = vmatmul.bf16.gmra.mxu0 %v27
  %v584 = vpop.f32.mrf.mxu0
  %v585 = vadd.f32 %v572, %v584
  %v586 = vpop.f32.mrf.mxu0
  %587 = vdwg.mxu0
  %588 = vmatpush.bf16.msra.mxu0 %v452
  %589 = vmatpush.bf16.msra.mxu0 %v451
  %590 = vmatpush.bf16.msra.mxu0 %v450
  %591 = vmatpush.bf16.msra.mxu0 %v449
  %592 = vmatpush.bf16.msra.mxu0 %v448
  %593 = vmatpush.bf16.msra.mxu0 %v447
  %594 = vmatpush.bf16.msra.mxu0 %v446
  %595 = vmatpush.bf16.msra.mxu0 %v445
  %596 = vmatmul.bf16.gmra.mxu0 %v28
  %v597 = vpop.f32.mrf.mxu0
  %v598 = vadd.f32 %v585, %v597
  %v599 = vpop.f32.mrf.mxu0
  %600 = vdwg.mxu0
  %601 = vmatpush.bf16.msra.mxu0 %v460
  %602 = vmatpush.bf16.msra.mxu0 %v459
  %603 = vmatpush.bf16.msra.mxu0 %v458
  %604 = vmatpush.bf16.msra.mxu0 %v457
  %605 = vmatpush.bf16.msra.mxu0 %v456
  %606 = vmatpush.bf16.msra.mxu0 %v455
  %607 = vmatpush.bf16.msra.mxu0 %v454
  %608 = vmatpush.bf16.msra.mxu0 %v453
  %609 = vmatmul.bf16.gmra.mxu0 %v29
  %v610 = vpop.f32.mrf.mxu0
  %v611 = vadd.f32 %v598, %v610
  %v612 = vpop.f32.mrf.mxu0
  %613 = vdwg.mxu0
  %614 = vmatpush.bf16.msra.mxu0 %v468
  %615 = vmatpush.bf16.msra.mxu0 %v467
  %616 = vmatpush.bf16.msra.mxu0 %v466
  %617 = vmatpush.bf16.msra.mxu0 %v465
  %618 = vmatpush.bf16.msra.mxu0 %v464
  %619 = vmatpush.bf16.msra.mxu0 %v463
  %620 = vmatpush.bf16.msra.mxu0 %v462
  %621 = vmatpush.bf16.msra.mxu0 %v461
  %622 = vmatmul.bf16.gmra.mxu0 %v30
  %v623 = vpop.f32.mrf.mxu0
  %v624 = vadd.f32 %v611, %v623
  %v625 = vpop.f32.mrf.mxu0
  %626 = vdwg.mxu0
  %627 = vmatpush.bf16.msra.mxu0 %v476
  %628 = vmatpush.bf16.msra.mxu0 %v475
  %629 = vmatpush.bf16.msra.mxu0 %v474
  %630 = vmatpush.bf16.msra.mxu0 %v473
  %631 = vmatpush.bf16.msra.mxu0 %v472
  %632 = vmatpush.bf16.msra.mxu0 %v471
  %633 = vmatpush.bf16.msra.mxu0 %v470
  %634 = vmatpush.bf16.msra.mxu0 %v469
  %635 = vmatmul.bf16.gmra.mxu0 %v31
  %v636 = vpop.f32.mrf.mxu0
  %v637 = vadd.f32 %v624, %v636
  %v638 = vpop.f32.mrf.mxu0
  %639 = vdwg.mxu0
  %640 = vmatpush.bf16.msra.mxu0 %v484
  %641 = vmatpush.bf16.msra.mxu0 %v483
  %642 = vmatpush.bf16.msra.mxu0 %v482
  %643 = vmatpush.bf16.msra.mxu0 %v481
  %644 = vmatpush.bf16.msra.mxu0 %v480
  %645 = vmatpush.bf16.msra.mxu0 %v479
  %646 = vmatpush.bf16.msra.mxu0 %v478
  %647 = vmatpush.bf16.msra.mxu0 %v477
  %648 = vmatmul.bf16.gmra.mxu0 %v32
  %v649 = vpop.f32.mrf.mxu0
  %v650 = vadd.f32 %v637, %v649
  %v651 = vpop.f32.mrf.mxu0
  %652 = vdwg.mxu0
  %v653 = vlaneseq
  %v654 = vand.u32 %v653, 127
  %v655 = vcvt.s32.f32 %v654
  %vm656 = vcmp.ge.s32.totalorder %v654, 0
  %vm657 = vcmp.lt.s32.totalorder %v654, 8
  %vm658 = vmand %vm656, %vm657
  %v659 = vsel %vm658, %v650, -1e+30
  %vm660 = vcmask 261120
  %v661 = vsel %vm660, %v659, -inf
  %662 = vmax.xlane.f32.xlu0 %v661
  %v663 = vpop.xlane.xlu0 %662
  %vm664 = vcmp.ge.f32.partialorder %v659, %v663
  %v665 = vsel %vm664, %v655, 32.0
  %v666 = vsel %vm660, %v665, inf
  %667 = vmin.xlane.f32.xlu0 %v666
  %v668 = vpop.xlane.xlu0 %667
  %v669 = vsub.f32 %v650, %v663
  %v670 = vsel %vm658, %v669, -1e+30
  %v671 = vmul.f32 %v670, 1.442695
  %v672 = vpow.pop %v671
  %v673 = vsel %vm660, %v672, 0.0
  %674 = vadd.xlane.f32.xlu0 %v673
  %v675 = vpop.xlane.xlu0 %674
  %v676 = vsub.f32 0.0, %v675
  %vm677 = vcmp.ge.s32.totalorder %v654, 8
  %vm678 = vcmp.lt.s32.totalorder %v654, 16
  %vm679 = vmand %vm677, %vm678
  %v680 = vsel %vm679, %v650, -1e+30
  %v681 = vsel %vm660, %v680, -inf
  %682 = vmax.xlane.f32.xlu0 %v681
  %v683 = vpop.xlane.xlu0 %682
  %vm684 = vcmp.ge.f32.partialorder %v680, %v683
  %v685 = vsel %vm684, %v655, 32.0
  %v686 = vsel %vm660, %v685, inf
  %687 = vmin.xlane.f32.xlu0 %v686
  %v688 = vpop.xlane.xlu0 %687
  %v689 = vsub.f32 %v650, %v683
  %v690 = vsel %vm679, %v689, -1e+30
  %v691 = vmul.f32 %v690, 1.442695
  %v692 = vpow.pop %v691
  %v693 = vsel %vm660, %v692, 0.0
  %694 = vadd.xlane.f32.xlu0 %v693
  %v695 = vpop.xlane.xlu0 %694
  %v696 = vsub.f32 0.0, %v695
  %vm697 = vcmp.gt.f32.partialorder %v696, %v676
  %v698 = vsel %vm697, %v696, %v676
  %v699 = vsel %vm697, %v688, %v668
  %vm700 = vcmp.ge.s32.totalorder %v654, 16
  %vm701 = vcmp.lt.s32.totalorder %v654, 24
  %vm702 = vmand %vm700, %vm701
  %v703 = vsel %vm702, %v650, -1e+30
  %v704 = vsel %vm660, %v703, -inf
  %705 = vmax.xlane.f32.xlu0 %v704
  %v706 = vpop.xlane.xlu0 %705
  %vm707 = vcmp.ge.f32.partialorder %v703, %v706
  %v708 = vsel %vm707, %v655, 32.0
  %v709 = vsel %vm660, %v708, inf
  %710 = vmin.xlane.f32.xlu0 %v709
  %v711 = vpop.xlane.xlu0 %710
  %v712 = vsub.f32 %v650, %v706
  %v713 = vsel %vm702, %v712, -1e+30
  %v714 = vmul.f32 %v713, 1.442695
  %v715 = vpow.pop %v714
  %v716 = vsel %vm660, %v715, 0.0
  %717 = vadd.xlane.f32.xlu0 %v716
  %v718 = vpop.xlane.xlu0 %717
  %v719 = vsub.f32 0.0, %v718
  %vm720 = vcmp.gt.f32.partialorder %v719, %v698
  %v721 = vsel %vm720, %v719, %v698
  %v722 = vsel %vm720, %v711, %v699
  %vm723 = vcmp.ge.s32.totalorder %v654, 24
  %vm724 = vcmp.lt.s32.totalorder %v654, 32
  %vm725 = vmand %vm723, %vm724
  %v726 = vsel %vm725, %v650, -1e+30
  %v727 = vsel %vm660, %v726, -inf
  %728 = vmax.xlane.f32.xlu0 %v727
  %v729 = vpop.xlane.xlu0 %728
  %vm730 = vcmp.ge.f32.partialorder %v726, %v729
  %v731 = vsel %vm730, %v655, 32.0
  %v732 = vsel %vm660, %v731, inf
  %733 = vmin.xlane.f32.xlu0 %v732
  %v734 = vpop.xlane.xlu0 %733
  %v735 = vsub.f32 %v650, %v729
  %v736 = vsel %vm725, %v735, -1e+30
  %v737 = vmul.f32 %v736, 1.442695
  %v738 = vpow.pop %v737
  %v739 = vsel %vm660, %v738, 0.0
  %740 = vadd.xlane.f32.xlu0 %v739
  %v741 = vpop.xlane.xlu0 %740
  %v742 = vsub.f32 0.0, %v741
  %vm743 = vcmp.gt.f32.partialorder %v742, %v721
  %v744 = vsel %vm743, %v734, %v722
  %v745 = vcvt.f32.s32.to.zero.pseudo %v744
  %vm746 = vcmp.eq.s32.totalorder %v654, %v745
  %v747 = vld [vmem:[%s3] sm:$0x1]
  %v749 = vperm.slane %v747, 0
  %v751 = vsel %vm746, %v749, 0.0
  %v752 = vsel %vm660, %v751, 0.0
  %753 = vadd.xlane.f32.xlu0 %v752
  %v754 = vpop.xlane.xlu0 %753
  %v755 = vcvt.f32.s32.to.zero.pseudo %v754
  %vm756 = vcmask 7168
  %757 = vst.msk [vmem:[%s4] sm:$0xff] %vm756, %v755
  // Predicated region
  $region18: #{confidence_based_routing.1} parent=0 // pred_check
    _
  $region19: #{confidence_based_routing.1} parent=0 // pred_check_branch
    %759 = sbr.rel (0) target = $region21
  $region20: #{confidence_based_routing.1} parent=0 // pred_region
    _
  $region21: #{confidence_based_routing.1} parent=0 // pred_fallthru
    _
  // Predicated region
  $region22: #{confidence_based_routing.1} parent=0 // pred_check
    _
  $region23: #{confidence_based_routing.1} parent=0 // pred_check_branch
    %761 = sbr.rel (0) target = $region25
  $region24: #{confidence_based_routing.1} parent=0 // pred_region
    _
  $region25: #{confidence_based_routing.1} parent=0 // pred_fallthru
    _

</llo_original>
